<compile_context>
chip_gen: v6e
topology: v6e:2x2x1
jax: 0.10.0
libtpu: 0.0.40
codegen_flags: <defaults>
</compile_context>

<pallas_src>
import jax
import jax.numpy as jnp
from jax.experimental import pallas as pl
from jax.experimental.pallas import tpu as pltpu


def _round_up(x: int, m: int) -> int:
    return (x + m - 1) // m * m


def _ceil_div(a: int, b: int) -> int:
    return -(-a // b)


def _vmem_capacity_bytes() -> int:
    """Physical VMEM per TensorCore, with a device_kind fallback."""
    try:
        info = pltpu.get_tpu_info()
        cap = getattr(info, "vmem_capacity_bytes", None)
        if cap:
            return int(cap)
    except Exception:
        pass
    try:
        kind = jax.devices()[0].device_kind.lower()
    except Exception:
        kind = ""
    return (64 << 20) if "v7" in kind else (128 << 20)


def _has_256_mxu() -> bool:
    """v6e / v7x have a 256x256 MXU; v5e and earlier are 128-wide."""
    try:
        kind = jax.devices()[0].device_kind.lower()
    except Exception:
        return False
    return not any(tag in kind for tag in ("v2", "v3", "v4", "v5"))


def _block_spec(shape, index_map, buffers=None):
    """BlockSpec with optional explicit buffer count (falls back gracefully)."""
    if buffers is None:
        return pl.BlockSpec(shape, index_map)
    try:
        return pl.BlockSpec(shape, index_map, pipeline_mode=pl.Buffered(buffers))
    except TypeError:
        return pl.BlockSpec(shape, index_map)


def rsmgc_kernel(x_ref, w_ref, b_ref, o_ref, acc_ref):
    # grid = (row_tiles, k_tiles); k is innermost ("arbitrary" reduction axis).
    k = pl.program_id(1)
    last_k = pl.num_programs(1) - 1

    # MXU matmul at native operand dtype, f32 accumulation.
    partial = jnp.dot(x_ref[...], w_ref[...], preferred_element_type=jnp.float32)

    @pl.when(k == 0)
    def _():
        acc_ref[...] = partial

    @pl.when(k > 0)
    def _():
        acc_ref[...] += partial

    @pl.when(k == last_k)
    def _():
        # Padded class columns carry a -1e30 bias: they never win the max and
        # their exp underflows to 0, so the reductions only see real classes.
        # (NB: -1e30 would overflow to -inf for a float16 output dtype; those
        #  columns are never stored, so this is only a caveat for refactors.)
        logits = acc_ref[...] + b_ref[...].astype(jnp.float32)
        m = jnp.max(logits, axis=-1, keepdims=True)
        shifted = logits - m
        lse = jnp.log(jnp.sum(jnp.exp(shifted), axis=-1, keepdims=True))
        out = shifted - lse
        # Store only the real class columns (masked lane store if C % 128 != 0);
        # avoids C_pad/C output write amplification and a wrapper-side slice.
        o_ref[...] = out[:, : o_ref.shape[-1]].astype(o_ref.dtype)


def rsmgc_forward(x, weight_fc, bias_c, *, tile_n=1024, matmul_dtype=None):
    """x: [N, F]; weight_fc: [F, C]; bias_c: [C] -> [N, C] log-probs."""
    N, F = x.shape
    F2, C = weight_fc.shape
    assert F == F2, "feature dims must match"

    out_dtype = x.dtype
    if matmul_dtype is not None:
        # Optional (accuracy permitting) bf16 MXU operands with f32 accumulation.
        x = x.astype(matmul_dtype)
        weight_fc = weight_fc.astype(matmul_dtype)
    op_dtype = x.dtype
    in_bytes = jnp.dtype(op_dtype).itemsize
    out_bytes = jnp.dtype(out_dtype).itemsize

    vmem_cap = _vmem_capacity_bytes()
    budget = int(0.60 * vmem_cap)          # working budget for tile selection
    use_256 = _has_256_mxu()

    # MXU-aware lane alignment; keep 128 when the dim is small so padded
    # columns don't burn exp/log (EUP) and store bandwidth.
    lane_align_f = 256 if (use_256 and F > 128) else 128
    lane_align_c = 256 if (use_256 and C > 128) else 128
    # Dtype-aware sublane (row) alignment: packed dtypes need 16/32 rows.
    row_align = {4: 8, 2: 16, 1: 32}.get(in_bytes, 8)

    C_pad = _round_up(C, lane_align_c)
    F_base = _round_up(F, lane_align_f)

    # ---- K (contraction) tiling: bound the resident W footprint in VMEM ----
    n_k = 1
    while True:
        tile_k = _round_up(_ceil_div(F_base, n_k), lane_align_f)
        w_bufs = 1 if n_k == 1 else 2      # constant block index -> 1 buffer
        if (w_bufs * tile_k * C_pad * in_bytes <= budget // 2) or tile_k == lane_align_f:
            break
        n_k *= 2
    TILE_K = tile_k
    F_pad = TILE_K * n_k
    w_bufs = 1 if n_k == 1 else 2

    # ---- Row (batch) tiling ----
    N_rows = _round_up(max(N, 1), row_align)

    def vmem_need(tn):
        return (2 * tn * TILE_K * in_bytes        # x tiles (double-buffered)
                + w_bufs * TILE_K * C_pad * in_bytes  # W
                + 8 * C_pad * 4                   # bias (single buffer, f32)
                + 2 * tn * C * out_bytes          # out tiles (double-buffered)
                + tn * C_pad * 4                  # f32 accumulator scratch
                + 3 * tn * C_pad * 4)             # f32 temporaries headroom

    TILE_N = min(_round_up(int(tile_n), row_align), N_rows)
    while TILE_N > row_align and vmem_need(TILE_N) > budget:
        TILE_N = max(row_align, _round_up(TILE_N // 2, row_align))
    # Guarantee >=2 row tiles when the batch allows it: feeds both TensorCores
    # on v7x (parallel axis) and keeps the input/output pipeline overlapped.
    while _ceil_div(N_rows, TILE_N) < 2 and TILE_N > row_align:
        TILE_N = max(row_align, _round_up(TILE_N // 2, row_align))

    N_pad = _round_up(N_rows, TILE_N)
    grid = (N_pad // TILE_N, n_k)

    # ---- Pad operands only when needed (wrapper pads are HBM copies) ----
    x_p = x
    if (N_pad - N) or (F_pad - F):
        x_p = jnp.pad(x, ((0, N_pad - N), (0, F_pad - F)))
    w_p = weight_fc
    if (F_pad - F) or (C_pad - C):
        w_p = jnp.pad(weight_fc, ((0, F_pad - F), (0, C_pad - C)))
    b_p = bias_c.astype(jnp.float32)
    if C_pad - C:
        b_p = jnp.pad(b_p, (0, C_pad - C), constant_values=-1e30)
    b_p = b_p.reshape(1, C_pad)

    need = vmem_need(TILE_N)
    vmem_limit = int(min(int(0.80 * vmem_cap), max(int(1.25 * need), 16 << 20)))

    out_padded = pl.pallas_call(
        rsmgc_kernel,
        out_shape=jax.ShapeDtypeStruct((N_pad, C), out_dtype),
        grid_spec=pltpu.PrefetchScalarGridSpec(
            num_scalar_prefetch=0,
            grid=grid,
            in_specs=[
                # x row/K tile (double-buffered by default).
                pl.BlockSpec((TILE_N, TILE_K), lambda i, k: (i, k)),
                # W: single-buffer when its block index is constant (n_k == 1).
                _block_spec((TILE_K, C_pad), lambda i, k: (0, k),
                            buffers=1 if n_k == 1 else None),
                # Bias: constant block index -> single buffer.
                _block_spec((1, C_pad), lambda i, k: (0, 0), buffers=1),
            ],
            # Output is only C classes wide; block index constant across k
            # (accumulator pattern, written back once per row tile).
            out_specs=pl.BlockSpec((TILE_N, C), lambda i, k: (i, 0)),
            scratch_shapes=[pltpu.VMEM((TILE_N, C_pad), jnp.float32)],
        ),
        compiler_params=pltpu.CompilerParams(
            dimension_semantics=("parallel", "arbitrary"),
            vmem_limit_bytes=vmem_limit,
        ),
        cost_estimate=pl.CostEstimate(
            flops=2 * N_pad * F_pad * C_pad,
            transcendentals=2 * N_pad * C_pad,     # exp + log
            bytes_accessed=(N_pad * F_pad * in_bytes
                            + F_pad * C_pad * in_bytes
                            + C_pad * 4
                            + N_pad * C * out_bytes),
        ),
    )(x_p, w_p, b_p)

    return out_padded if N_pad == N else out_padded[:N]


def reference_forward(x, weight_fc, bias_c):
    logits = x @ weight_fc + bias_c[None, :]
    return jax.nn.log_softmax(logits, axis=1)


if __name__ == "__main__":
    key = jax.random.PRNGKey(0)
    k_x, k_w, k_b = jax.random.split(key, 3)

    # Small shapes consistent with the module: batch=8, n_feat=32, n_class=16.
    N, n_feat, n_class = 8, 32, 16
    enable_bias = True

    x = jax.random.normal(k_x, (N, n_feat), dtype=jnp.float32)

    # nn.Linear-style init: U(-1/sqrt(n_feat), 1/sqrt(n_feat)).
    # PyTorch stores weight as [C, F]; we keep it as [F, C] for x @ W.
    bound = 1.0 / (n_feat ** 0.5)
    weight_fc = jax.random.uniform(
        k_w, (n_feat, n_class), minval=-bound, maxval=bound, dtype=jnp.float32)
    if enable_bias:
        bias_c = jax.random.uniform(
            k_b, (n_class,), minval=-bound, maxval=bound, dtype=jnp.float32)
    else:
        bias_c = jnp.zeros((n_class,), dtype=jnp.float32)

    out = rsmgc_forward(x, weight_fc, bias_c)
    out = jax.block_until_ready(out)

    ref = reference_forward(x, weight_fc, bias_c)
    assert out.shape == (N, n_class)
    assert jnp.allclose(out, ref, atol=1e-5, rtol=1e-5), "mismatch vs reference"

    print("KERNEL_OK")
</pallas_src>

<mosaic_0001>
module attributes {stable_mosaic.version = 11 : i64} {
  func.func @rsmgc_kernel(%arg0: i32, %arg1: i32, %arg2: memref<8x128xf32, #tpu.memory_space<vmem>>, %arg3: memref<128x128xf32, #tpu.memory_space<vmem>>, %arg4: memref<1x128xf32, #tpu.memory_space<vmem>>, %arg5: memref<8x16xf32, #tpu.memory_space<vmem>>, %arg6: memref<8x128xf32, #tpu.memory_space<vmem>>) attributes {dimension_semantics = [#tpu.dimension_semantics<parallel>, #tpu.dimension_semantics<arbitrary>], iteration_bounds = array<i64: 1, 1>, scalar_prefetch = 0 : i64, scratch_operands = 1 : i64, tpu.core_type = #tpu.core_type<tc>, window_params = [{transform_indices = @transform_0, window_bounds = array<i64: 8, 128>}, {pipeline_mode = #tpu.pipeline_mode<synchronous>, transform_indices = @transform_1, window_bounds = array<i64: 128, 128>}, {pipeline_mode = #tpu.pipeline_mode<synchronous>, transform_indices = @transform_2, window_bounds = array<i64: 1, 128>}, {transform_indices = @transform_3, window_bounds = array<i64: 8, 16>}]} {
    %c0 = arith.constant 0 : index
    %c0_0 = arith.constant 0 : index
    %0 = vector.load %arg2[%c0, %c0_0] : memref<8x128xf32, #tpu.memory_space<vmem>>, vector<8x128xf32>
    %c0_1 = arith.constant 0 : index
    %c0_2 = arith.constant 0 : index
    %1 = vector.load %arg3[%c0_1, %c0_2] : memref<128x128xf32, #tpu.memory_space<vmem>>, vector<128x128xf32>
    %cst = arith.constant dense<0.000000e+00> : vector<8x128xf32>
    %2 = tpu.matmul %0, %1, %cst {dimension_numbers = #tpu.dot_dimension_numbers<[1], [0], [0], [1], [0, 0, 1, 1], [], []>} : vector<8x128xf32>, vector<128x128xf32>, vector<8x128xf32> -> vector<8x128xf32>
    %c0_i32 = arith.constant 0 : i32
    %3 = arith.cmpi eq, %arg1, %c0_i32 : i32
    %4 = arith.extui %3 : i1 to i32
    %c0_i32_3 = arith.constant 0 : i32
    %5 = arith.cmpi ne, %4, %c0_i32_3 : i32
    scf.if %5 {
      %c0_8 = arith.constant 0 : index
      %c0_9 = arith.constant 0 : index
      %12 = vector.load %arg6[%c0_8, %c0_9] : memref<8x128xf32, #tpu.memory_space<vmem>>, vector<8x128xf32>
      tpu.vector_store %arg6[%c0_8, %c0_9], %2 {strides = array<i32>} : memref<8x128xf32, #tpu.memory_space<vmem>>, vector<8x128xf32>,
    } else {
    }
    %c0_i32_4 = arith.constant 0 : i32
    %6 = arith.cmpi sgt, %arg1, %c0_i32_4 : i32
    %7 = arith.extui %6 : i1 to i32
    %c0_i32_5 = arith.constant 0 : i32
    %8 = arith.cmpi ne, %7, %c0_i32_5 : i32
    scf.if %8 {
      %c0_8 = arith.constant 0 : index
      %c0_9 = arith.constant 0 : index
      %12 = vector.load %arg6[%c0_8, %c0_9] : memref<8x128xf32, #tpu.memory_space<vmem>>, vector<8x128xf32>
      %13 = arith.addf %12, %2 : vector<8x128xf32>
      %c0_10 = arith.constant 0 : index
      %c0_11 = arith.constant 0 : index
      %14 = vector.load %arg6[%c0_10, %c0_11] : memref<8x128xf32, #tpu.memory_space<vmem>>, vector<8x128xf32>
      tpu.vector_store %arg6[%c0_10, %c0_11], %13 {strides = array<i32>} : memref<8x128xf32, #tpu.memory_space<vmem>>, vector<8x128xf32>,
    } else {
    }
    %c0_i32_6 = arith.constant 0 : i32
    %9 = arith.cmpi eq, %arg1, %c0_i32_6 : i32
    %10 = arith.extui %9 : i1 to i32
    %c0_i32_7 = arith.constant 0 : i32
    %11 = arith.cmpi ne, %10, %c0_i32_7 : i32
    scf.if %11 {
      %c0_8 = arith.constant 0 : index
      %c0_9 = arith.constant 0 : index
      %12 = vector.load %arg6[%c0_8, %c0_9] : memref<8x128xf32, #tpu.memory_space<vmem>>, vector<8x128xf32>
      %c0_10 = arith.constant 0 : index
      %c0_11 = arith.constant 0 : index
      %13 = vector.load %arg4[%c0_10, %c0_11] : memref<1x128xf32, #tpu.memory_space<vmem>>, vector<1x128xf32>
      %14 = vector.broadcast %13 : vector<1x128xf32> to vector<8x128xf32>
      %15 = arith.addf %12, %14 : vector<8x128xf32>
      %cst_12 = arith.constant dense<0xFF800000> : vector<8xf32>
      %16 = vector.multi_reduction <maximumf>, %15, %cst_12 [1] : vector<8x128xf32> to vector<8xf32>
      %17 = vector.shape_cast %16 : vector<8xf32> to vector<8x1xf32>
      %18 = vector.broadcast %17 : vector<8x1xf32> to vector<8x128xf32>
      %19 = arith.subf %15, %18 : vector<8x128xf32>
      %20 = math.exp %19 : vector<8x128xf32>
      %cst_13 = arith.constant dense<0.000000e+00> : vector<8xf32>
      %21 = vector.multi_reduction <add>, %20, %cst_13 [1] : vector<8x128xf32> to vector<8xf32>
      %22 = vector.shape_cast %21 : vector<8xf32> to vector<8x1xf32>
      %23 = math.log %22 : vector<8x1xf32>
      %24 = vector.broadcast %23 : vector<8x1xf32> to vector<8x128xf32>
      %25 = arith.subf %19, %24 : vector<8x128xf32>
      %26 = vector.extract_strided_slice %25 {offsets = [0, 0], sizes = [8, 16], strides = [1, 1]} : vector<8x128xf32> to vector<8x16xf32>
      %c0_14 = arith.constant 0 : index
      %c0_15 = arith.constant 0 : index
      %27 = vector.load %arg5[%c0_14, %c0_15] : memref<8x16xf32, #tpu.memory_space<vmem>>, vector<8x16xf32>
      tpu.vector_store %arg5[%c0_14, %c0_15], %26 {strides = array<i32>} : memref<8x16xf32, #tpu.memory_space<vmem>>, vector<8x16xf32>,
    } else {
    }
    return
  }
  func.func @transform_0(%arg0: i32, %arg1: i32) -> (i32, i32) {
    %c0_i32 = arith.constant 0 : i32
    return %arg0, %arg1 : i32, i32
  }
  func.func @transform_1(%arg0: i32, %arg1: i32) -> (i32, i32) {
    %c0_i32 = arith.constant 0 : i32
    %c0_i32_0 = arith.constant 0 : i32
    return %c0_i32, %arg1 : i32, i32
  }
  func.func @transform_2(%arg0: i32, %arg1: i32) -> (i32, i32) {
    %c0_i32 = arith.constant 0 : i32
    %c0_i32_0 = arith.constant 0 : i32
    %c0_i32_1 = arith.constant 0 : i32
    return %c0_i32, %c0_i32_0 : i32, i32
  }
  func.func @transform_3(%arg0: i32, %arg1: i32) -> (i32, i32) {
    %c0_i32 = arith.constant 0 : i32
    %c0_i32_0 = arith.constant 0 : i32
    return %arg0, %c0_i32 : i32, i32
  }
}

</mosaic_0001>

<llo_original>
// kernel: tpu_custom_call.1
$region0: #{tpu_custom_call.1}
  #allocation0 [shape = 'u32[]', space=smem, size = 0x4, offset = 0x4, fixed_abs, tag = 'smem constant byte address 0x4 - core index']
  #allocation1 [shape = 'u32[144,128]{1,0:T(1,128)}', space=vmem, size = 0x12000, scoped, tag = 'internal scratch']
  #allocation2 [shape = 'f32[8,128]{1,0:T(8,128)}', space=vmem, size = 0x1000, scoped, tag = 'scratch operand']
  %s0 = inlined_call_operand.hbm [shape: f32[8,128], index: 0, kind: input, shape index: {}]
  %s1 = inlined_call_operand.hbm [shape: f32[128,128], index: 1, kind: input, shape index: {}]
  %s2 = inlined_call_operand.vmem [shape: f32[1,128], index: 2, kind: input, shape index: {}]
  %s3 = inlined_call_operand.hbm [shape: f32[8,16], index: 3, kind: output, shape index: {}]
  %s4 = sld [smem:[#allocation0]]
  $region42: #{tpu_custom_call.1} parent=0
    _
  %s6 = ssub.s32 1, %s4
  %s7 = scalar_select 0, %s6, %s4
  $region1: #{tpu_custom_call.1} parent=0
    #allocation3 [shape = 'u8[4096]{0}', space=vmem, size = 0x1000, scoped, tag = 'input window, operand 0, single buffered']
    #allocation4 [shape = 's32[1]{0}', space=sflag, size = 0x4, scoped, tag = 'scoped memory for tpu_custom_call.1']
    #allocation5 [shape = 's32[1]{0}', space=sflag, size = 0x4, scoped, tag = 'scoped memory for tpu_custom_call.1']
    #allocation6 [shape = 'u8[65536]{0}', space=vmem, size = 0x10000, scoped, tag = 'input window, operand 1, single buffered']
    #allocation7 [shape = 's32[1]{0}', space=sflag, size = 0x4, scoped, tag = 'scoped memory for tpu_custom_call.1']
    #allocation8 [shape = 'u8[4096]{0}', space=vmem, size = 0x1000, scoped, tag = 'output window, operand 0, single buffered']
    %8 = vsyncpa [#allocation4], 0
    %9 = vsyncpa [#allocation7], 0
    %10 = vsyncpa [#allocation5], 0
    // Predicated region
    $region2: #{tpu_custom_call.1} parent=1 // pred_check
      _
    $region3: #{tpu_custom_call.1} parent=1 // pred_check_branch
      %12 = sbr.rel (0) target = $region5
    $region4: #{tpu_custom_call.1} parent=1 // pred_region
      %s14 = ssub.s32 128, 128
      %15 = vsyncadd [#allocation4], %s14
      %s17 = sshll.u32 [#allocation3], 4
      %s18 = int_to_ptr.vmem [resolvable:$true] %s17
      %20 = dma.hbm_to_vmem [thread:$0]  %s0, 128, %s18, [#allocation4]
    $region5: #{tpu_custom_call.1} parent=1 // pred_fallthru
      _
    // Predicated region
    $region6: #{tpu_custom_call.1} parent=1 // pred_check
      _
    $region7: #{tpu_custom_call.1} parent=1 // pred_check_branch
      %22 = sbr.rel (0) target = $region9
    $region8: #{tpu_custom_call.1} parent=1 // pred_region
      %s24 = ssub.s32 2048, 2048
      %25 = vsyncadd [#allocation7], %s24
      %s26 = sshll.u32 [#allocation6], 4
      %s27 = int_to_ptr.vmem [resolvable:$true] %s26
      %32 = dma.hbm_to_vmem [thread:$0]  %s1, 2048, %s27, [#allocation7], 128, 128, 8
    $region9: #{tpu_custom_call.1} parent=1 // pred_fallthru
      _
    // Predicated region
    $region10: #{tpu_custom_call.1} parent=1 // pred_check
      _
    $region11: #{tpu_custom_call.1} parent=1 // pred_check_branch
      %34 = sbr.rel (0) target = $region13
    $region12: #{tpu_custom_call.1} parent=1 // pred_region
      _
    $region13: #{tpu_custom_call.1} parent=1 // pred_fallthru
      _
    // Predicated region
    $region14: #{tpu_custom_call.1} parent=1 // pred_check
      _
    $region15: #{tpu_custom_call.1} parent=1 // pred_check_branch
      %36 = sbr.rel (0) target = $region17
    $region16: #{tpu_custom_call.1} parent=1 // pred_region
      %37 = dma.done [#allocation4], 128
    $region17: #{tpu_custom_call.1} parent=1 // pred_fallthru
      _
    // Predicated region
    $region18: #{tpu_custom_call.1} parent=1 // pred_check
      _
    $region19: #{tpu_custom_call.1} parent=1 // pred_check_branch
      %39 = sbr.rel (0) target = $region21
    $region20: #{tpu_custom_call.1} parent=1 // pred_region
      %40 = dma.done [#allocation7], 2048
    $region21: #{tpu_custom_call.1} parent=1 // pred_fallthru
      _
    %v41 = vld [vmem:[#allocation3] sm:$0xff]
    %v42 = vld [vmem:[#allocation6] sm:$0xff]
    %v43 = vld [vmem:[#allocation6 + $0x8] sm:$0xff]
    %v44 = vld [vmem:[#allocation6 + $0x10] sm:$0xff]
    %v45 = vld [vmem:[#allocation6 + $0x18] sm:$0xff]
    %v46 = vld [vmem:[#allocation6 + $0x20] sm:$0xff]
    %v47 = vld [vmem:[#allocation6 + $0x28] sm:$0xff]
    %v48 = vld [vmem:[#allocation6 + $0x30] sm:$0xff]
    %v49 = vld [vmem:[#allocation6 + $0x38] sm:$0xff]
    %v50 = vld [vmem:[#allocation6 + $0x40] sm:$0xff]
    %v51 = vld [vmem:[#allocation6 + $0x48] sm:$0xff]
    %v52 = vld [vmem:[#allocation6 + $0x50] sm:$0xff]
    %v53 = vld [vmem:[#allocation6 + $0x58] sm:$0xff]
    %v54 = vld [vmem:[#allocation6 + $0x60] sm:$0xff]
    %v55 = vld [vmem:[#allocation6 + $0x68] sm:$0xff]
    %v56 = vld [vmem:[#allocation6 + $0x70] sm:$0xff]
    %v57 = vld [vmem:[#allocation6 + $0x78] sm:$0xff]
    %58 = vmatprep.subr.mxu0 0.0
    %59 = vmatpush1.msra.mxu0 %v57
    %60 = vmatprep.subr.mxu0 0.0
    %61 = vmatpush1.msra.mxu0 %v56
    %62 = vmatprep.subr.mxu0 0.0
    %63 = vmatpush1.msra.mxu0 %v55
    %64 = vmatprep.subr.mxu0 0.0
    %65 = vmatpush1.msra.mxu0 %v54
    %66 = vmatprep.subr.mxu0 0.0
    %67 = vmatpush1.msra.mxu0 %v53
    %68 = vmatprep.subr.mxu0 0.0
    %69 = vmatpush1.msra.mxu0 %v52
    %70 = vmatprep.subr.mxu0 0.0
    %71 = vmatpush1.msra.mxu0 %v51
    %72 = vmatprep.subr.mxu0 0.0
    %73 = vmatpush1.msra.mxu0 %v50
    %74 = vmatprep.subr.mxu0 0.0
    %75 = vmatpush1.msra.mxu0 %v49
    %76 = vmatprep.subr.mxu0 0.0
    %77 = vmatpush1.msra.mxu0 %v48
    %78 = vmatprep.subr.mxu0 0.0
    %79 = vmatpush1.msra.mxu0 %v47
    %80 = vmatprep.subr.mxu0 0.0
    %81 = vmatpush1.msra.mxu0 %v46
    %82 = vmatprep.subr.mxu0 0.0
    %83 = vmatpush1.msra.mxu0 %v45
    %84 = vmatprep.subr.mxu0 0.0
    %85 = vmatpush1.msra.mxu0 %v44
    %86 = vmatprep.subr.mxu0 0.0
    %87 = vmatpush1.msra.mxu0 %v43
    %88 = vmatprep.subr.mxu0 0.0
    %89 = vmatpush1.msra.mxu0 %v42
    %90 = vmatprep.subr.mxu0 0.0
    %91 = vmatpush2.msra.mxu0 0.0
    %92 = vmatprep.subr.mxu0 0.0
    %93 = vmatpush2.msra.mxu0 0.0
    %94 = vmatprep.subr.mxu0 0.0
    %95 = vmatpush2.msra.mxu0 0.0
    %96 = vmatprep.subr.mxu0 0.0
    %97 = vmatpush2.msra.mxu0 0.0
    %98 = vmatprep.subr.mxu0 0.0
    %99 = vmatpush2.msra.mxu0 0.0
    %100 = vmatprep.subr.mxu0 0.0
    %101 = vmatpush2.msra.mxu0 0.0
    %102 = vmatprep.subr.mxu0 0.0
    %103 = vmatpush2.msra.mxu0 0.0
    %104 = vmatprep.subr.mxu0 0.0
    %105 = vmatpush2.msra.mxu0 0.0
    %106 = vmatprep.subr.mxu0 0.0
    %107 = vmatpush2.msra.mxu0 0.0
    %108 = vmatprep.subr.mxu0 0.0
    %109 = vmatpush2.msra.mxu0 0.0
    %110 = vmatprep.subr.mxu0 0.0
    %111 = vmatpush2.msra.mxu0 0.0
    %112 = vmatprep.subr.mxu0 0.0
    %113 = vmatpush2.msra.mxu0 0.0
    %114 = vmatprep.subr.mxu0 0.0
    %115 = vmatpush2.msra.mxu0 0.0
    %116 = vmatprep.subr.mxu0 0.0
    %117 = vmatpush2.msra.mxu0 0.0
    %118 = vmatprep.subr.mxu0 0.0
    %119 = vmatpush2.msra.mxu0 0.0
    %120 = vmatprep.subr.mxu0 0.0
    %121 = vmatpush2.msra.mxu0 0.0
    %122 = vmatprep.mubr.f32.mxu0 0.0
    %123 = vmatmul.mubr.f32.gmra.mxu0 %v41
    %v124 = vpop.f32.mrf.mxu0
    %v125 = vadd.f32 0.0, %v124
    %v126 = vpop.f32.mrf.mxu0
    %127 = vdwg.mxu0
    %p128 = scmp.eq.s32.totalorder 0, 0
    // Predicated region
    $region22: #{tpu_custom_call.1} parent=1 // pred_check
      %p129 = pneg %p128
    $region23: #{tpu_custom_call.1} parent=1 // pred_check_branch
      %131 = sbr.rel (%p129) target = $region25
    $region24: #{tpu_custom_call.1} parent=1 // pred_region
      %132 = vst [vmem:[#allocation2] sm:$0xff] %v125
    $region25: #{tpu_custom_call.1} parent=1 // pred_fallthru
      _
    %p133 = scmp.gt.s32.totalorder 0, 0
    // Predicated region
    $region26: #{tpu_custom_call.1} parent=1 // pred_check
      %p134 = pneg %p133
    $region27: #{tpu_custom_call.1} parent=1 // pred_check_branch
      %136 = sbr.rel (%p134) target = $region29
    $region28: #{tpu_custom_call.1} parent=1 // pred_region
      %v137 = vld [vmem:[#allocation2] sm:$0xff]
      %v138 = vadd.f32 %v137, %v125
      %139 = vst [vmem:[#allocation2] sm:$0xff] %v138
    $region29: #{tpu_custom_call.1} parent=1 // pred_fallthru
      _
    // Predicated region
    $region30: #{tpu_custom_call.1} parent=1 // pred_check
      %p140 = pneg %p128
    $region31: #{tpu_custom_call.1} parent=1 // pred_check_branch
      %142 = sbr.rel (%p140) target = $region33
    $region32: #{tpu_custom_call.1} parent=1 // pred_region
      %v143 = vld [vmem:[#allocation2] sm:$0xff]
      %v144 = vld [vmem:[%s2] sm:$0x1]
      %v146 = vlaneseq
      %v147 = vshrl.u32 %v146, 7
      %v148 = vsub.s32 0, %v147
      %v149 = vrot.slane %v144, %v148
      %v151 = vadd.f32 %v143, %v149
      %152 = vmax.xlane.f32.xlu0 %v151
      %v153 = vpop.xlane.xlu0 %152
      %v154 = vsub.f32 %v151, %v153
      %v155 = vmul.f32 %v154, 1.442695
      %v156 = vpow.pop %v155
      %157 = vadd.xlane.f32.xlu0 %v156
      %v158 = vpop.xlane.xlu0 %157
      %v159 = vlog2.pop %v158
      %v160 = vmul.f32 %v159, 0.6931472
      %v161 = vsub.f32 %v154, %v160
      %vm162 = vcmask 130048
      %163 = vst.msk [vmem:[#allocation8] sm:$0xff] %vm162, %v161
    $region33: #{tpu_custom_call.1} parent=1 // pred_fallthru
      _
    // Predicated region
    $region34: #{tpu_custom_call.1} parent=1 // pred_check
      _
    $region35: #{tpu_custom_call.1} parent=1 // pred_check_branch
      %165 = sbr.rel (0) target = $region37
    $region36: #{tpu_custom_call.1} parent=1 // pred_region
      %s167 = ssub.s32 128, 128
      %168 = vsyncadd [#allocation5], %s167
      %s170 = sshll.u32 [#allocation8], 4
      %s171 = int_to_ptr.vmem [resolvable:$true] %s170
      %173 = dma.vmem_to_hbm [thread:$0]  %s171, 128, %s3, [#allocation5]
    $region37: #{tpu_custom_call.1} parent=1 // pred_fallthru
      _
    // Predicated region
    $region38: #{tpu_custom_call.1} parent=1 // pred_check
      _
    $region39: #{tpu_custom_call.1} parent=1 // pred_check_branch
      %175 = sbr.rel (0) target = $region41
    $region40: #{tpu_custom_call.1} parent=1 // pred_region
      %176 = dma.done [#allocation5], 128
    $region41: #{tpu_custom_call.1} parent=1 // pred_fallthru
      _
    %177 = vsyncpa [#allocation4], 1
    %178 = vsyncpa [#allocation7], 1
    %179 = vsyncpa [#allocation5], 1

</llo_original>
